<compile_context>
chip_gen: v5e
topology: v5e:2x2
jax: 0.10.0
libtpu: 0.0.40
codegen_flags: <defaults>
</compile_context>

<pallas_src>
import numpy as np
import jax
import jax.numpy as jnp
from jax import lax
from jax.experimental import pallas as pl
from jax.experimental.pallas import tpu as pltpu


# -----------------------------------------------------------------------------
# Kernel: runs one time-chunk of Tc recurrent steps; state carried in VMEM
# scratch across chunks (grid iterations).
# -----------------------------------------------------------------------------
def rwa_seq_kernel(xw_ref, state0_ref, wh_ref, out_ref, state_sc):
    C = wh_ref.shape[0]          # num_cells (static)
    Tc = xw_ref.shape[0]         # time-chunk length (static)

    # Load the initial recurrent state into the VMEM carry on the first chunk.
    @pl.when(pl.program_id(0) == 0)
    def _():
        state_sc[...] = state0_ref[...]

    def step(i, carry):
        st = state_sc[...]                       # (B, 4C) f32 = [n | d | h | a_max]
        n_prev = st[:, 0 * C:1 * C]
        d_prev = st[:, 1 * C:2 * C]
        h_prev = st[:, 2 * C:3 * C]
        a_max = st[:, 3 * C:4 * C]

        # ---- recurrent h-matmul (bf16 MXU, f32 accumulation) ----------------
        hw = jnp.dot(h_prev.astype(jnp.bfloat16), wh_ref[...],
                     preferred_element_type=jnp.float32)          # (B, 4C)
        # Wh is zero-padded in the u slot, so this is a single lane-aligned
        # full-vreg add with the precomputed x-projection.
        s = xw_ref[i] + hw                                        # (B, 4C)

        u_t = s[:, 0 * C:1 * C]
        g_t = s[:, 1 * C:2 * C]
        a_t = s[:, 2 * C:3 * C]
        dec_lin = s[:, 3 * C:4 * C]

        # ---- RWA recurrence (all f32) ----------------------------------------
        decay = jax.nn.sigmoid(dec_lin)
        z_t = u_t * jnp.tanh(g_t)

        exp_neg_decay = jnp.exp(-decay)
        a_decay = a_max * exp_neg_decay
        a_newmax = jnp.maximum(a_decay, a_t)
        exp_diff = jnp.exp(a_max - a_newmax)
        exp_scaled = jnp.exp(a_t - a_newmax)

        carry_scale = exp_neg_decay * exp_diff
        n_new = n_prev * carry_scale + z_t * exp_scaled
        d_new = d_prev * carry_scale + exp_scaled
        h_new = jnp.tanh(n_new * pl.reciprocal(d_new, approx=True))

        # ---- write state: direct lane sub-slice stores (no concatenate) ------
        state_sc[:, 0 * C:1 * C] = n_new
        state_sc[:, 1 * C:2 * C] = d_new
        state_sc[:, 2 * C:3 * C] = h_new
        state_sc[:, 3 * C:4 * C] = a_newmax
        out_ref[i] = state_sc[...]               # one full-width (B, 4C) store
        return carry

    unroll = 2 if (Tc % 2 == 0 and Tc >= 2) else 1
    lax.fori_loop(0, Tc, step, 0, unroll=unroll)


# -----------------------------------------------------------------------------
# Wrappers
# -----------------------------------------------------------------------------
def rwa_sequence_forward(x_seq, n0, d0, h0, a_max0, packed, *, time_chunk=4):
    """Run T RWACell steps in one pallas_call.

    x_seq: (T, B, F) f32.  Returns (n, d, h, a_max) each of shape (T, B, C)
    (the state after every step; index [-1] is the final state).
    """
    wx, wh, bias = packed
    T, B, F = x_seq.shape
    C = wh.shape[0]

    # Pick a chunk length that divides T.
    Tc = max(1, min(time_chunk, T))
    while T % Tc:
        Tc -= 1

    # ---- hoisted, dependency-free x-projection (one big XLA matmul) ----------
    xw = jnp.dot(x_seq.reshape(T * B, F).astype(jnp.bfloat16), wx,
                 preferred_element_type=jnp.float32).reshape(T, B, 4 * C) + bias

    state0 = jnp.concatenate([n0, d0, h0, a_max0], axis=1)        # (B, 4C) f32

    out = pl.pallas_call(
        rwa_seq_kernel,
        out_shape=jax.ShapeDtypeStruct((T, B, 4 * C), jnp.float32),
        grid_spec=pltpu.PrefetchScalarGridSpec(
            num_scalar_prefetch=0,
            grid=(T // Tc,),
            in_specs=[
                pl.BlockSpec((Tc, B, 4 * C), lambda c: (c, 0, 0)),  # xw chunk (streamed)
                pl.BlockSpec((B, 4 * C), lambda c: (0, 0)),         # initial state
                pl.BlockSpec((C, 4 * C), lambda c: (0, 0)),         # Wh (resident, padded)
            ],
            out_specs=pl.BlockSpec((Tc, B, 4 * C), lambda c: (c, 0, 0)),
            scratch_shapes=[pltpu.VMEM((B, 4 * C), jnp.float32)],   # state carry
        ),
        compiler_params=pltpu.CompilerParams(
            dimension_semantics=("arbitrary",)),                    # sequential time axis
    )(xw, state0, wh)

    # Split the lane-dense slab in the wrapper (free layout plumbing in XLA).
    n_seq = out[:, :, 0 * C:1 * C]
    d_seq = out[:, :, 1 * C:2 * C]
    h_seq = out[:, :, 2 * C:3 * C]
    amax_seq = out[:, :, 3 * C:4 * C]
    return n_seq, d_seq, h_seq, amax_seq


def rwa_cell_forward(x_t, n_t, d_t, h_t, a_max_t, packed):
    """One RWACell step (matches RWACell.forward). Returns (n, d, h, a_max)."""
    n_s, d_s, h_s, a_s = rwa_sequence_forward(
        x_t[None], n_t, d_t, h_t, a_max_t, packed, time_chunk=1)
    return n_s[0], d_s[0], h_s[0], a_s[0]


# -----------------------------------------------------------------------------
# Parameters
# -----------------------------------------------------------------------------
def init_params(key, num_features, num_cells, init=1.0):
    """Deterministic parameter init mirroring RWACell.__init__ (weights stored (in, out))."""
    F, C = num_features, num_cells
    ga = np.sqrt(6.0 * init / (F + 2.0 * C))
    uf = np.sqrt(6.0 * init / (F + C))
    ks = jax.random.split(key, 4)
    w_u = jax.random.uniform(ks[0], (F, C), jnp.float32, -uf, uf)
    b_u = jnp.zeros((1, C), jnp.float32)
    w_g = jax.random.uniform(ks[1], (F + C, C), jnp.float32, -ga, ga)
    b_g = jnp.zeros((1, C), jnp.float32)
    w_a = jax.random.uniform(ks[2], (F + C, C), jnp.float32, -ga, ga)
    w_d = jax.random.uniform(ks[3], (F + C, C), jnp.float32, -ga, ga)
    return (w_u, b_u,
            w_g[:F], w_g[F:], b_g,
            w_a[:F], w_a[F:],
            w_d[:F], w_d[F:])


def pack_params(params):
    """Fuse weights: Wx (F,4C) bf16, Wh padded to (C,4C) bf16 (zero u-slot), bias (1,4C) f32."""
    wu, bu, wgx, wgh, bg, wax, wah, wdx, wdh = params
    C = wgh.shape[0]
    wx = jnp.concatenate([wu, wgx, wax, wdx], axis=1).astype(jnp.bfloat16)
    wh = jnp.concatenate([jnp.zeros((C, C), jnp.float32), wgh, wah, wdh],
                         axis=1).astype(jnp.bfloat16)
    zeros = jnp.zeros_like(bu)
    bias = jnp.concatenate([bu, bg, zeros, zeros], axis=1).astype(jnp.float32)
    return wx, wh, bias


# -----------------------------------------------------------------------------
# Pure-JAX reference (mirrors the PyTorch forward; same bf16 matmul inputs as
# the kernel so the comparison isolates kernel plumbing errors).
# -----------------------------------------------------------------------------
def rwa_cell_reference(x, n, d, h, a_max, params):
    wu, bu, wgx, wgh, bg, wax, wah, wdx, wdh = params
    bf = jnp.bfloat16
    dot = lambda a, b: jnp.dot(a.astype(bf), b.astype(bf),
                               preferred_element_type=jnp.float32)
    u_t = dot(x, wu) + bu
    g_t = dot(x, wgx) + dot(h, wgh) + bg
    a_t = dot(x, wax) + dot(h, wah)
    decay = jax.nn.sigmoid(dot(x, wdx) + dot(h, wdh))
    z_t = u_t * jnp.tanh(g_t)
    end = jnp.exp(-decay)
    a_decay = a_max * end
    a_newmax = jnp.maximum(a_decay, a_t)
    exp_diff = jnp.exp(a_max - a_newmax)
    exp_scaled = jnp.exp(a_t - a_newmax)
    n_new = n * end * exp_diff + z_t * exp_scaled
    d_new = d * end * exp_diff + exp_scaled
    h_new = jnp.tanh(n_new / d_new)
    return n_new, d_new, h_new, a_newmax


if __name__ == "__main__":
    B, F, C, T = 8, 16, 32, 8   # batch, num_features, num_cells, sequence length

    key = jax.random.PRNGKey(0)
    k_param, k_x = jax.random.split(key)

    params = init_params(k_param, F, C, init=1.0)
    packed = pack_params(params)

    x_seq = jax.random.normal(k_x, (T, B, F), jnp.float32)
    # init_hidden semantics: n = d = h = 0, a_max = -1e38
    n0 = jnp.zeros((B, C), jnp.float32)
    d0 = jnp.zeros((B, C), jnp.float32)
    h0 = jnp.zeros((B, C), jnp.float32)
    a0 = jnp.full((B, C), -1e38, jnp.float32)

    # ---- single step (exactly RWACell.forward) ------------------------------
    n1, d1, h1, am1 = rwa_cell_forward(x_seq[0], n0, d0, h0, a0, packed)
    jax.block_until_ready((n1, d1, h1, am1))
    n1r, d1r, h1r, am1r = rwa_cell_reference(x_seq[0], n0, d0, h0, a0, params)
    for got, ref in ((n1, n1r), (d1, d1r), (h1, h1r), (am1, am1r)):
        # tolerance covers approx-reciprocal + accumulation-order differences
        np.testing.assert_allclose(np.asarray(got), np.asarray(ref),
                                   rtol=5e-3, atol=5e-3)

    # ---- T-step sequence: time-chunked grid, state carried in VMEM scratch ----
    n_s, d_s, h_s, am_s = rwa_sequence_forward(x_seq, n0, d0, h0, a0, packed,
                                               time_chunk=4)
    jax.block_until_ready((n_s, d_s, h_s, am_s))

    nr, dr, hr, amr = n0, d0, h0, a0
    for t in range(T):
        nr, dr, hr, amr = rwa_cell_reference(x_seq[t], nr, dr, hr, amr, params)
        # looser tolerance: approx reciprocal + bf16 re-quantization of the
        # recurrent h compound slightly over steps
        np.testing.assert_allclose(np.asarray(n_s[t]), np.asarray(nr), rtol=5e-2, atol=5e-2)
        np.testing.assert_allclose(np.asarray(d_s[t]), np.asarray(dr), rtol=5e-2, atol=5e-2)
        np.testing.assert_allclose(np.asarray(h_s[t]), np.asarray(hr), rtol=5e-2, atol=5e-2)
        np.testing.assert_allclose(np.asarray(am_s[t]), np.asarray(amr), rtol=5e-2, atol=5e-2)

    print("KERNEL_OK")
</pallas_src>

<mosaic_0001>
module attributes {stable_mosaic.version = 11 : i64} {
  func.func @rwa_seq_kernel(%arg0: i32, %arg1: memref<1x8x128xf32, #tpu.memory_space<vmem>>, %arg2: memref<8x128xf32, #tpu.memory_space<vmem>>, %arg3: memref<32x128xbf16, #tpu.memory_space<vmem>>, %arg4: memref<1x8x128xf32, #tpu.memory_space<vmem>>, %arg5: memref<8x128xf32, #tpu.memory_space<vmem>>) attributes {dimension_semantics = [#tpu.dimension_semantics<arbitrary>], iteration_bounds = array<i64: 1>, scalar_prefetch = 0 : i64, scratch_operands = 1 : i64, tpu.core_type = #tpu.core_type<tc>, window_params = [{transform_indices = @transform_0, window_bounds = array<i64: 1, 8, 128>}, {pipeline_mode = #tpu.pipeline_mode<synchronous>, transform_indices = @transform_1, window_bounds = array<i64: 8, 128>}, {pipeline_mode = #tpu.pipeline_mode<synchronous>, transform_indices = @transform_2, window_bounds = array<i64: 32, 128>}, {transform_indices = @transform_3, window_bounds = array<i64: 1, 8, 128>}]} {
    %c0_i32 = arith.constant 0 : i32
    %0 = arith.cmpi eq, %arg0, %c0_i32 : i32
    %1 = arith.extui %0 : i1 to i32
    %c0_i32_0 = arith.constant 0 : i32
    %2 = arith.cmpi ne, %1, %c0_i32_0 : i32
    scf.if %2 {
      %c0_18 = arith.constant 0 : index
      %c0_19 = arith.constant 0 : index
      %53 = vector.load %arg2[%c0_18, %c0_19] : memref<8x128xf32, #tpu.memory_space<vmem>>, vector<8x128xf32>
      %c0_20 = arith.constant 0 : index
      %c0_21 = arith.constant 0 : index
      %54 = vector.load %arg5[%c0_20, %c0_21] : memref<8x128xf32, #tpu.memory_space<vmem>>, vector<8x128xf32>
      tpu.vector_store %arg5[%c0_20, %c0_21], %53 {strides = array<i32>} : memref<8x128xf32, #tpu.memory_space<vmem>>, vector<8x128xf32>,
    } else {
    }
    %c0_i32_1 = arith.constant 0 : i32
    %c0 = arith.constant 0 : index
    %c0_2 = arith.constant 0 : index
    %3 = vector.load %arg5[%c0, %c0_2] : memref<8x128xf32, #tpu.memory_space<vmem>>, vector<8x128xf32>
    %4 = vector.extract_strided_slice %3 {offsets = [0, 0], sizes = [8, 32], strides = [1, 1]} : vector<8x128xf32> to vector<8x32xf32>
    %5 = vector.extract_strided_slice %3 {offsets = [0, 32], sizes = [8, 32], strides = [1, 1]} : vector<8x128xf32> to vector<8x32xf32>
    %6 = vector.extract_strided_slice %3 {offsets = [0, 64], sizes = [8, 32], strides = [1, 1]} : vector<8x128xf32> to vector<8x32xf32>
    %7 = vector.extract_strided_slice %3 {offsets = [0, 96], sizes = [8, 32], strides = [1, 1]} : vector<8x128xf32> to vector<8x32xf32>
    %8 = arith.truncf %6 : vector<8x32xf32> to vector<8x32xbf16>
    %c0_3 = arith.constant 0 : index
    %c0_4 = arith.constant 0 : index
    %9 = vector.load %arg3[%c0_3, %c0_4] : memref<32x128xbf16, #tpu.memory_space<vmem>>, vector<32x128xbf16>
    %cst = arith.constant dense<0.000000e+00> : vector<8x128xf32>
    %10 = tpu.matmul %8, %9, %cst {dimension_numbers = #tpu.dot_dimension_numbers<[1], [0], [0], [1], [0, 0, 1, 1], [], []>} : vector<8x32xbf16>, vector<32x128xbf16>, vector<8x128xf32> -> vector<8x128xf32>
    %11 = arith.index_cast %c0_i32_1 : i32 to index
    %c0_5 = arith.constant 0 : index
    %c0_6 = arith.constant 0 : index
    %12 = vector.load %arg1[%11, %c0_5, %c0_6] : memref<1x8x128xf32, #tpu.memory_space<vmem>>, vector<1x8x128xf32>
    %13 = vector.shape_cast %12 : vector<1x8x128xf32> to vector<8x128xf32>
    %14 = arith.addf %13, %10 : vector<8x128xf32>
    %15 = vector.extract_strided_slice %14 {offsets = [0, 0], sizes = [8, 32], strides = [1, 1]} : vector<8x128xf32> to vector<8x32xf32>
    %16 = vector.extract_strided_slice %14 {offsets = [0, 32], sizes = [8, 32], strides = [1, 1]} : vector<8x128xf32> to vector<8x32xf32>
    %17 = vector.extract_strided_slice %14 {offsets = [0, 64], sizes = [8, 32], strides = [1, 1]} : vector<8x128xf32> to vector<8x32xf32>
    %18 = vector.extract_strided_slice %14 {offsets = [0, 96], sizes = [8, 32], strides = [1, 1]} : vector<8x128xf32> to vector<8x32xf32>
    %19 = arith.negf %18 : vector<8x32xf32>
    %20 = math.exp %19 : vector<8x32xf32>
    %cst_7 = arith.constant 1.000000e+00 : f32
    %21 = vector.broadcast %cst_7 : f32 to vector<8x32xf32>
    %22 = arith.addf %21, %20 : vector<8x32xf32>
    %23 = arith.divf %21, %22 : vector<8x32xf32>
    %24 = math.tanh %16 : vector<8x32xf32>
    %25 = arith.mulf %15, %24 : vector<8x32xf32>
    %cst_8 = arith.constant 0.000000e+00 : f32
    %26 = vector.broadcast %cst_8 : f32 to vector<8x32xf32>
    %27 = arith.subf %26, %23 : vector<8x32xf32>
    %28 = math.exp %27 : vector<8x32xf32>
    %29 = arith.mulf %7, %28 : vector<8x32xf32>
    %30 = arith.maximumf %29, %17 : vector<8x32xf32>
    %31 = arith.subf %7, %30 : vector<8x32xf32>
    %32 = math.exp %31 : vector<8x32xf32>
    %33 = arith.subf %17, %30 : vector<8x32xf32>
    %34 = math.exp %33 : vector<8x32xf32>
    %35 = arith.mulf %28, %32 : vector<8x32xf32>
    %36 = arith.mulf %4, %35 : vector<8x32xf32>
    %37 = arith.mulf %25, %34 : vector<8x32xf32>
    %38 = arith.addf %36, %37 : vector<8x32xf32>
    %39 = arith.mulf %5, %35 : vector<8x32xf32>
    %40 = arith.addf %39, %34 : vector<8x32xf32>
    %41 = tpu.reciprocal %40 {approx = true} : vector<8x32xf32> -> vector<8x32xf32>
    %42 = arith.mulf %38, %41 : vector<8x32xf32>
    %43 = math.tanh %42 : vector<8x32xf32>
    %c0_9 = arith.constant 0 : index
    %c0_10 = arith.constant 0 : index
    %44 = vector.load %arg5[%c0_9, %c0_10] : memref<8x128xf32, #tpu.memory_space<vmem>>, vector<8x32xf32>
    tpu.vector_store %arg5[%c0_9, %c0_10], %38 {strides = array<i32>} : memref<8x128xf32, #tpu.memory_space<vmem>>, vector<8x32xf32>,
    %c0_11 = arith.constant 0 : index
    %c32 = arith.constant 32 : index
    %45 = vector.load %arg5[%c0_11, %c32] : memref<8x128xf32, #tpu.memory_space<vmem>>, vector<8x32xf32>
    tpu.vector_store %arg5[%c0_11, %c32], %40 {strides = array<i32>} : memref<8x128xf32, #tpu.memory_space<vmem>>, vector<8x32xf32>,
    %c0_12 = arith.constant 0 : index
    %c64 = arith.constant 64 : index
    %46 = vector.load %arg5[%c0_12, %c64] : memref<8x128xf32, #tpu.memory_space<vmem>>, vector<8x32xf32>
    tpu.vector_store %arg5[%c0_12, %c64], %43 {strides = array<i32>} : memref<8x128xf32, #tpu.memory_space<vmem>>, vector<8x32xf32>,
    %c0_13 = arith.constant 0 : index
    %c96 = arith.constant 96 : index
    %47 = vector.load %arg5[%c0_13, %c96] : memref<8x128xf32, #tpu.memory_space<vmem>>, vector<8x32xf32>
    tpu.vector_store %arg5[%c0_13, %c96], %30 {strides = array<i32>} : memref<8x128xf32, #tpu.memory_space<vmem>>, vector<8x32xf32>,
    %c0_14 = arith.constant 0 : index
    %c0_15 = arith.constant 0 : index
    %48 = vector.load %arg5[%c0_14, %c0_15] : memref<8x128xf32, #tpu.memory_space<vmem>>, vector<8x128xf32>
    %49 = arith.index_cast %c0_i32_1 : i32 to index
    %c0_16 = arith.constant 0 : index
    %c0_17 = arith.constant 0 : index
    %50 = vector.load %arg4[%49, %c0_16, %c0_17] : memref<1x8x128xf32, #tpu.memory_space<vmem>>, vector<1x8x128xf32>
    %51 = vector.shape_cast %50 : vector<1x8x128xf32> to vector<8x128xf32>
    %52 = vector.shape_cast %48 : vector<8x128xf32> to vector<1x8x128xf32>
    tpu.vector_store %arg4[%49, %c0_16, %c0_17], %52 {strides = array<i32>} : memref<1x8x128xf32, #tpu.memory_space<vmem>>, vector<1x8x128xf32>,
    %c1_i32 = arith.constant 1 : i32
    return
  }
  func.func @transform_0(%arg0: i32) -> (i32, i32, i32) {
    %c0_i32 = arith.constant 0 : i32
    %c0_i32_0 = arith.constant 0 : i32
    %c0_i32_1 = arith.constant 0 : i32
    return %arg0, %c0_i32, %c0_i32_0 : i32, i32, i32
  }
  func.func @transform_1(%arg0: i32) -> (i32, i32) {
    %c0_i32 = arith.constant 0 : i32
    %c0_i32_0 = arith.constant 0 : i32
    %c0_i32_1 = arith.constant 0 : i32
    return %c0_i32, %c0_i32_0 : i32, i32
  }
  func.func @transform_2(%arg0: i32) -> (i32, i32) {
    %c0_i32 = arith.constant 0 : i32
    %c0_i32_0 = arith.constant 0 : i32
    %c0_i32_1 = arith.constant 0 : i32
    return %c0_i32, %c0_i32_0 : i32, i32
  }
  func.func @transform_3(%arg0: i32) -> (i32, i32, i32) {
    %c0_i32 = arith.constant 0 : i32
    %c0_i32_0 = arith.constant 0 : i32
    %c0_i32_1 = arith.constant 0 : i32
    return %arg0, %c0_i32, %c0_i32_0 : i32, i32, i32
  }
}

</mosaic_0001>

<llo_original>
// kernel: tpu_custom_call.1
$region0: #{tpu_custom_call.1}
  #allocation0 [shape = 'u32[]', space=smem, size = 0x4, offset = 0x4, fixed_abs, tag = 'smem constant byte address 0x4 - core index']
  #allocation1 [shape = 'u32[72,128]{1,0:T(1,128)}', space=vmem, size = 0x9000, scoped, tag = 'internal scratch']
  #allocation2 [shape = 'f32[8,128]{1,0:T(8,128)}', space=vmem, size = 0x1000, scoped, tag = 'scratch operand']
  %s0 = inlined_call_operand.hbm [shape: f32[1,8,128], index: 0, kind: input, shape index: {}]
  %s1 = inlined_call_operand.hbm [shape: f32[8,128], index: 1, kind: input, shape index: {}]
  %s2 = inlined_call_operand.hbm [shape: bf16[32,128], index: 2, kind: input, shape index: {}]
  %s3 = inlined_call_operand.hbm [shape: f32[1,8,128], index: 3, kind: output, shape index: {}]
  %s4 = sld [smem:[#allocation0]]
  $region38: #{tpu_custom_call.1} parent=0
    _
  %s6 = ssub.s32 1, %s4
  %s7 = scalar_select 0, %s6, %s4
  $region1: #{tpu_custom_call.1} parent=0
    #allocation3 [shape = 'u8[4096]{0}', space=vmem, size = 0x1000, scoped, tag = 'input window, operand 0, single buffered']
    #allocation4 [shape = 's32[1]{0}', space=sflag, size = 0x4, scoped, tag = 'scoped memory for tpu_custom_call.1']
    #allocation5 [shape = 's32[1]{0}', space=sflag, size = 0x4, scoped, tag = 'scoped memory for tpu_custom_call.1']
    #allocation6 [shape = 'u8[4096]{0}', space=vmem, size = 0x1000, scoped, tag = 'input window, operand 1, single buffered']
    #allocation7 [shape = 's32[1]{0}', space=sflag, size = 0x4, scoped, tag = 'scoped memory for tpu_custom_call.1']
    #allocation8 [shape = 'u8[8192]{0}', space=vmem, size = 0x2000, scoped, tag = 'input window, operand 2, single buffered']
    #allocation9 [shape = 'u8[4096]{0}', space=vmem, size = 0x1000, scoped, tag = 'output window, operand 0, single buffered']
    %8 = vsyncpa [#allocation4], 0
    %9 = vsyncpa [#allocation7], 0
    %10 = vsyncpa [#allocation5], 0
    // Predicated region
    $region2: #{tpu_custom_call.1} parent=1 // pred_check
      _
    $region3: #{tpu_custom_call.1} parent=1 // pred_check_branch
      %12 = sbr.rel (0) target = $region5
    $region4: #{tpu_custom_call.1} parent=1 // pred_region
      %14 = vsyncadd [#allocation4], 0
      %s16 = sshll.u32 %s0, 4
      %s17 = int_to_ptr.hbm [resolvable:$true] %s16
      %s18 = sshll.u32 [#allocation3], 4
      %s19 = int_to_ptr.vmem [resolvable:$true] %s18
      %21 = dma.hbm_to_vmem [thread:$0]  %s17, 128, %s19, [#allocation4]
    $region5: #{tpu_custom_call.1} parent=1 // pred_fallthru
      _
    // Predicated region
    $region6: #{tpu_custom_call.1} parent=1 // pred_check
      _
    $region7: #{tpu_custom_call.1} parent=1 // pred_check_branch
      %23 = sbr.rel (0) target = $region9
    $region8: #{tpu_custom_call.1} parent=1 // pred_region
      %25 = vsyncadd [#allocation7], 0
      %s27 = sshll.u32 %s1, 4
      %s28 = int_to_ptr.hbm [resolvable:$true] %s27
      %s29 = sshll.u32 [#allocation6], 4
      %s30 = int_to_ptr.vmem [resolvable:$true] %s29
      %32 = dma.hbm_to_vmem [thread:$0]  %s28, 128, %s30, [#allocation7]
    $region9: #{tpu_custom_call.1} parent=1 // pred_fallthru
      _
    // Predicated region
    $region10: #{tpu_custom_call.1} parent=1 // pred_check
      _
    $region11: #{tpu_custom_call.1} parent=1 // pred_check_branch
      %34 = sbr.rel (0) target = $region13
    $region12: #{tpu_custom_call.1} parent=1 // pred_region
      %36 = vsyncadd [#allocation7], 0
      %s37 = sshll.u32 %s2, 4
      %s38 = int_to_ptr.hbm [resolvable:$true] %s37
      %s39 = sshll.u32 [#allocation8], 4
      %s40 = int_to_ptr.vmem [resolvable:$true] %s39
      %45 = dma.hbm_to_vmem [thread:$0]  %s38, 256, %s40, [#allocation7], 64, 64, 4
    $region13: #{tpu_custom_call.1} parent=1 // pred_fallthru
      _
    // Predicated region
    $region14: #{tpu_custom_call.1} parent=1 // pred_check
      _
    $region15: #{tpu_custom_call.1} parent=1 // pred_check_branch
      %47 = sbr.rel (0) target = $region17
    $region16: #{tpu_custom_call.1} parent=1 // pred_region
      %49 = dma.done [#allocation4], 128
    $region17: #{tpu_custom_call.1} parent=1 // pred_fallthru
      _
    // Predicated region
    $region18: #{tpu_custom_call.1} parent=1 // pred_check
      _
    $region19: #{tpu_custom_call.1} parent=1 // pred_check_branch
      %51 = sbr.rel (0) target = $region21
    $region20: #{tpu_custom_call.1} parent=1 // pred_region
      %53 = dma.done [#allocation7], 128
    $region21: #{tpu_custom_call.1} parent=1 // pred_fallthru
      _
    // Predicated region
    $region22: #{tpu_custom_call.1} parent=1 // pred_check
      _
    $region23: #{tpu_custom_call.1} parent=1 // pred_check_branch
      %55 = sbr.rel (0) target = $region25
    $region24: #{tpu_custom_call.1} parent=1 // pred_region
      %57 = dma.done [#allocation7], 256
    $region25: #{tpu_custom_call.1} parent=1 // pred_fallthru
      _
    %p59 = scmp.eq.s32.totalorder 0, 0
    // Predicated region
    $region26: #{tpu_custom_call.1} parent=1 // pred_check
      %p60 = pneg %p59
    $region27: #{tpu_custom_call.1} parent=1 // pred_check_branch
      %62 = sbr.rel (%p60) target = $region29
    $region28: #{tpu_custom_call.1} parent=1 // pred_region
      %v63 = vld [vmem:[#allocation6] sm:$0xff]
      %64 = vst [vmem:[#allocation2] sm:$0xff] %v63
    $region29: #{tpu_custom_call.1} parent=1 // pred_fallthru
      _
    %v65 = vld [vmem:[#allocation2] sm:$0xff]
    %v66 = vpack.c.bf16 %v65, %v65
    %v67 = vld [vmem:[#allocation8] sm:$0xf]
    %v68 = vld [vmem:[#allocation8 + $0x4] sm:$0xf]
    %v69 = vld [vmem:[#allocation8 + $0x8] sm:$0xf]
    %v70 = vld [vmem:[#allocation8 + $0xc] sm:$0xf]
    %72 = vrot.lane.b32.xlu0 %v66, 64
    %v73 = vpop.permute.xlu0 %72
    %v78 = vunpack.c.l.b16 %v67
    %v79 = vunpack.c.l.b16 %v68
    %v80 = vunpack.c.l.b16 %v69
    %v81 = vunpack.c.l.b16 %v70
    %v82 = vpack.c.b16 %v79, %v78
    %v83 = vpack.c.b16 %v81, %v80
    %vm86 = vcmask 261120
    %v88 = vsel %vm86, %v73, 0
    %90 = vmatpush.bf16.msra.mxu0 0
    %91 = vmatpush.bf16.msra.mxu0 0
    %92 = vmatpush.bf16.msra.mxu0 0
    %93 = vmatpush.bf16.msra.mxu0 0
    %94 = vmatpush.bf16.msra.mxu0 0
    %95 = vmatpush.bf16.msra.mxu0 0
    %96 = vmatpush.bf16.msra.mxu0 %v83
    %97 = vmatpush.bf16.msra.mxu0 %v82
    %98 = vmatmul.bf16.gmra.mxu0 %v88
    %v99 = vpop.f32.mrf.mxu0
    %v100 = vadd.f32 0.0, %v99
    %v101 = vpop.f32.mrf.mxu0
    %102 = vdwg.mxu0
    %v103 = vld [vmem:[#allocation3] sm:$0xff]
    %v104 = vadd.f32 %v103, %v100
    %v105 = vxor.u32 %v104, 2147483648
    %v106 = vmul.f32 %v105, 1.442695
    %v107 = vpow.pop %v106
    %v108 = vadd.f32 %v107, 1.0
    %v109 = vrcp.pop %v108
    %v110 = vmul.f32 %v108, %v109
    %v111 = vsub.f32 1.0, %v110
    %v112 = vmul.f32 %v109, %v111
    %v113 = vadd.f32 %v109, %v112
    %vm114 = vweird.f32 %v108
    %vm115 = vweird.f32 %v109
    %vm116 = vmor %vm114, %vm115
    %v117 = vsel %vm116, %v109, %v113
    %v118 = vand.u32 2147483647, %v108
    %vm119 = vcmp.eq.f32.partialorder %v118, 8.507059e+37
    %v120 = vand.u32 %v108, 2147483648
    %v121 = vor.u32 1.1754944e-38, %v120
    %v122 = vsel %vm119, %v121, %v117
    %v123 = vmul.f32 1.0, %v122
    %v124 = vtanh.pop %v104
    %126 = vrot.lane.b32.xlu0 %v124, 96
    %v127 = vpop.permute.xlu0 %126
    %v129 = vmul.f32 %v104, %v127
    %v130 = vsub.f32 0.0, %v123
    %v131 = vmul.f32 %v130, 1.442695
    %v132 = vpow.pop %v131
    %v133 = vmul.f32 %v65, %v132
    %135 = vrot.lane.b32.xlu0 %v104, 32
    %v136 = vpop.permute.xlu0 %135
    %v138 = vmax.f32 %v133, %v136
    %v139 = vsub.f32 %v65, %v138
    %v140 = vmul.f32 %v139, 1.442695
    %v141 = vpow.pop %v140
    %143 = vrot.lane.b32.xlu0 %v138, 96
    %v144 = vpop.permute.xlu0 %143
    %v146 = vsub.f32 %v104, %v144
    %v147 = vmul.f32 %v146, 1.442695
    %v148 = vpow.pop %v147
    %v149 = vmul.f32 %v132, %v141
    %151 = vrot.lane.b32.xlu0 %v149, 32
    %v152 = vpop.permute.xlu0 %151
    %v154 = vmul.f32 %v65, %v152
    %156 = vrot.lane.b32.xlu0 %v148, 64
    %v157 = vpop.permute.xlu0 %156
    %v159 = vmul.f32 %v129, %v157
    %v160 = vadd.f32 %v154, %v159
    %161 = vrot.lane.b32.xlu0 %v149, 64
    %v162 = vpop.permute.xlu0 %161
    %v164 = vmul.f32 %v65, %v162
    %165 = vrot.lane.b32.xlu0 %v148, 96
    %v166 = vpop.permute.xlu0 %165
    %v168 = vadd.f32 %v164, %v166
    %v169 = vrcp.pop %v168
    %171 = vrot.lane.b32.xlu0 %v169, 96
    %v172 = vpop.permute.xlu0 %171
    %v174 = vmul.f32 %v160, %v172
    %v175 = vtanh.pop %v174
    %176 = vst.msk [vmem:[#allocation2] sm:$0xff] %vm86, %v160
    %vm177 = vcmask 523520
    %178 = vst.msk [vmem:[#allocation2] sm:$0xff] %vm177, %v168
    %180 = vrot.lane.b32.xlu0 %v175, 64
    %v181 = vpop.permute.xlu0 %180
    %vm183 = vcmask 785920
    %184 = vst.msk [vmem:[#allocation2] sm:$0xff] %vm183, %v181
    %vm185 = vcmask 1048320
    %186 = vst.msk [vmem:[#allocation2] sm:$0xff] %vm185, %v138
    %v187 = vld [vmem:[#allocation2] sm:$0xff]
    %188 = vst [vmem:[#allocation9] sm:$0xff] %v187
    // Predicated region
    $region30: #{tpu_custom_call.1} parent=1 // pred_check
      _
    $region31: #{tpu_custom_call.1} parent=1 // pred_check_branch
      %190 = sbr.rel (0) target = $region33
    $region32: #{tpu_custom_call.1} parent=1 // pred_region
      %192 = vsyncadd [#allocation5], 0
      %s194 = sshll.u32 [#allocation9], 4
      %s195 = int_to_ptr.vmem [resolvable:$true] %s194
      %s196 = sshll.u32 %s3, 4
      %s197 = int_to_ptr.hbm [resolvable:$true] %s196
      %199 = dma.vmem_to_hbm [thread:$0]  %s195, 128, %s197, [#allocation5]
    $region33: #{tpu_custom_call.1} parent=1 // pred_fallthru
      _
    // Predicated region
    $region34: #{tpu_custom_call.1} parent=1 // pred_check
      _
    $region35: #{tpu_custom_call.1} parent=1 // pred_check_branch
      %201 = sbr.rel (0) target = $region37
    $region36: #{tpu_custom_call.1} parent=1 // pred_region
      %203 = dma.done [#allocation5], 128
    $region37: #{tpu_custom_call.1} parent=1 // pred_fallthru
      _
    %204 = vsyncpa [#allocation4], 1
    %205 = vsyncpa [#allocation7], 1
    %206 = vsyncpa [#allocation5], 1

</llo_original>
